<compile_context>
chip_gen: v7x
topology: tpu7x:2x2x1
jax: 0.10.0
libtpu: 0.0.40
codegen_flags: <defaults>
</compile_context>

<pallas_src>
import functools

import jax
import jax.numpy as jnp
from jax.experimental import pallas as pl
from jax.experimental.pallas import tpu as pltpu


def _sage_kernel(adj_ref, xp_ref, self_ref, o_ref, acc_ref, *, ones_col):
    """One (row-tile, k-tile) step of out = (adj @ xp_aug)/row_sum + self_term."""
    k = pl.program_id(1)

    @pl.when(k == 0)
    def _init():
        acc_ref[...] = jnp.zeros_like(acc_ref)

    # bf16 x bf16 -> f32 accumulation on the MXU. Column `ones_col` of xp_aug
    # is all ones, so that column of the accumulator is exactly row_sum.
    acc_ref[...] += jnp.dot(adj_ref[...], xp_ref[...],
                            preferred_element_type=jnp.float32)

    @pl.when(k == pl.num_programs(1) - 1)
    def _finalize():
        acc = acc_ref[...]
        # Pull the row_sum column out of the accumulator (tiny masked lane
        # reduce, once per output tile).
        lane = jax.lax.broadcasted_iota(jnp.int32, acc.shape, 1)
        row_sum = jnp.sum(jnp.where(lane == ones_col, acc, 0.0),
                          axis=1, keepdims=True)
        row_sum = jnp.where(row_sum == 0.0, 1.0, row_sum)
        inv = pl.reciprocal(row_sum, approx=False)
        o_ref[...] = (acc * inv + self_ref[...]).astype(o_ref.dtype)


def graphsage_conv(adj, x, weight, bias, *, tm=128, tk=128):
    """adj: (N, N); x: (N, C); weight: (O, 2C) torch nn.Linear layout; bias: (O,).

    For large graphs raise tm/tk (512-2048) to approach the HBM roofline; keep
    2 (double-buffered) bf16 adj tiles under the per-chip scoped VMEM budget
    (~16 MiB v5e default, ~32 MiB v6e/v7x).
    """
    N, C = x.shape
    O = weight.shape[0]

    # Split the Linear weight once: concat([x, x_neigh]) @ W.T
    #   == x @ W_self + x_neigh @ W_neigh.
    w_self = jnp.transpose(weight[:, :C])    # (C, O)
    w_neigh = jnp.transpose(weight[:, C:])   # (C, O)

    # Tiny (N*C*O) projections hoisted out of the N^2 kernel loop.
    xp = jnp.dot(x, w_neigh)                          # (N, O)
    self_term = jnp.dot(x, w_self) + bias[None, :]    # (N, O)

    # Lane-dense output: pad O (+1 for the folded ones/row_sum column) up to a
    # multiple of 128 so stores are unmasked.
    o_pad = pl.cdiv(O + 1, 128) * 128

    # Pad N so adj tiles divide evenly. Zero padding is exact: padded rows get
    # row_sum==0 -> 1 and are sliced away below.
    n_rows = pl.cdiv(N, tm) * tm
    n_cols = pl.cdiv(N, tk) * tk

    adj_p = jnp.pad(adj, ((0, n_rows - N), (0, n_cols - N)))
    xp_aug = jnp.zeros((n_cols, o_pad), jnp.float32)
    xp_aug = xp_aug.at[:N, :O].set(xp)
    xp_aug = xp_aug.at[:N, O].set(1.0)        # ones column -> row_sum via MXU
    self_p = jnp.zeros((n_rows, o_pad), jnp.float32).at[:N, :O].set(self_term)

    # adj is 0/1 -> exact in bf16; bf16 halves the dominant N^2 HBM traffic and
    # feeds the native bf16 MXU. Accumulation stays f32 in the kernel.
    adj_bf = adj_p.astype(jnp.bfloat16)
    xp_bf = xp_aug.astype(jnp.bfloat16)

    grid = (n_rows // tm, n_cols // tk)
    kernel = functools.partial(_sage_kernel, ones_col=O)

    out_p = pl.pallas_call(
        kernel,
        out_shape=jax.ShapeDtypeStruct((n_rows, o_pad), jnp.float32),
        grid_spec=pltpu.PrefetchScalarGridSpec(
            num_scalar_prefetch=0,
            grid=grid,
            in_specs=[
                pl.BlockSpec((tm, tk), lambda i, k: (i, k)),       # adj tile
                pl.BlockSpec((tk, o_pad), lambda i, k: (k, 0)),    # xp_aug tile
                pl.BlockSpec((tm, o_pad), lambda i, k: (i, 0)),    # self_term
            ],
            out_specs=pl.BlockSpec((tm, o_pad), lambda i, k: (i, 0)),
            scratch_shapes=[pltpu.VMEM((tm, o_pad), jnp.float32)],
        ),
        compiler_params=pltpu.CompilerParams(
            # Row tiles are independent -> megacore splits them on v7x;
            # k is the reduction axis (accumulator resident across it).
            dimension_semantics=("parallel", "arbitrary"),
        ),
    )(adj_bf, xp_bf, self_p)

    return out_p[:N, :O].astype(x.dtype)


def _reference(adj, x, weight, bias):
    row_sum = jnp.sum(adj, axis=1, keepdims=True)
    row_sum = jnp.where(row_sum == 0.0, 1.0, row_sum)
    x_neigh = (adj / row_sum) @ x
    h = jnp.concatenate([x, x_neigh], axis=-1)
    return h @ weight.T + bias


if __name__ == "__main__":
    key = jax.random.PRNGKey(0)
    N, IN_C, OUT_C = 256, 16, 32

    k_adj, k_x, k_w, k_b = jax.random.split(key, 4)

    # Sparse binary adjacency; force a couple of isolated nodes to exercise the
    # row_sum==0 -> 1 path.
    adj = (jax.random.uniform(k_adj, (N, N)) < 0.05).astype(jnp.float32)
    adj = adj.at[0, :].set(0.0)
    adj = adj.at[7, :].set(0.0)

    x = jax.random.normal(k_x, (N, IN_C), dtype=jnp.float32)

    # Deterministic parameter init matching nn.Linear(in*2, out).
    fan_in = 2 * IN_C
    bound = 1.0 / (fan_in ** 0.5)
    weight = jax.random.uniform(
        k_w, (OUT_C, 2 * IN_C), minval=-bound, maxval=bound, dtype=jnp.float32
    )
    bias = jax.random.uniform(
        k_b, (OUT_C,), minval=-bound, maxval=bound, dtype=jnp.float32
    )

    out = graphsage_conv(adj, x, weight, bias)
    jax.block_until_ready(out)

    ref = _reference(adj, x, weight, bias)
    assert out.shape == (N, OUT_C)
    # bf16 feeds in the aggregation matmul -> relaxed tolerance vs. f32 ref.
    assert jnp.allclose(out, ref, atol=1e-2, rtol=1e-2), float(
        jnp.max(jnp.abs(out - ref))
    )

    print("KERNEL_OK")
</pallas_src>

<mosaic_0001>
module attributes {stable_mosaic.version = 11 : i64} {
  func.func @_sage_kernel(%arg0: i32, %arg1: i32, %arg2: memref<128x128xbf16, #tpu.memory_space<vmem>>, %arg3: memref<128x128xbf16, #tpu.memory_space<vmem>>, %arg4: memref<128x128xf32, #tpu.memory_space<vmem>>, %arg5: memref<128x128xf32, #tpu.memory_space<vmem>>, %arg6: memref<128x128xf32, #tpu.memory_space<vmem>>) attributes {dimension_semantics = [#tpu.dimension_semantics<parallel>, #tpu.dimension_semantics<arbitrary>], iteration_bounds = array<i64: 2, 2>, scalar_prefetch = 0 : i64, scratch_operands = 1 : i64, tpu.core_type = #tpu.core_type<tc>, window_params = [{transform_indices = @transform_0, window_bounds = array<i64: 128, 128>}, {transform_indices = @transform_1, window_bounds = array<i64: 128, 128>}, {transform_indices = @transform_2, window_bounds = array<i64: 128, 128>}, {transform_indices = @transform_3, window_bounds = array<i64: 128, 128>}]} {
    %c0_i32 = arith.constant 0 : i32
    %0 = arith.cmpi eq, %arg1, %c0_i32 : i32
    %1 = arith.extui %0 : i1 to i32
    %c0_i32_0 = arith.constant 0 : i32
    %2 = arith.cmpi ne, %1, %c0_i32_0 : i32
    scf.if %2 {
      %cst_9 = arith.constant 0.000000e+00 : f32
      %12 = vector.broadcast %cst_9 : f32 to vector<128x128xf32>
      %c0_10 = arith.constant 0 : index
      %c0_11 = arith.constant 0 : index
      %13 = vector.load %arg6[%c0_10, %c0_11] : memref<128x128xf32, #tpu.memory_space<vmem>>, vector<128x128xf32>
      tpu.vector_store %arg6[%c0_10, %c0_11], %12 {strides = array<i32>} : memref<128x128xf32, #tpu.memory_space<vmem>>, vector<128x128xf32>,
    } else {
    }
    %c0 = arith.constant 0 : index
    %c0_1 = arith.constant 0 : index
    %3 = vector.load %arg6[%c0, %c0_1] : memref<128x128xf32, #tpu.memory_space<vmem>>, vector<128x128xf32>
    %c0_2 = arith.constant 0 : index
    %c0_3 = arith.constant 0 : index
    %4 = vector.load %arg2[%c0_2, %c0_3] : memref<128x128xbf16, #tpu.memory_space<vmem>>, vector<128x128xbf16>
    %c0_4 = arith.constant 0 : index
    %c0_5 = arith.constant 0 : index
    %5 = vector.load %arg3[%c0_4, %c0_5] : memref<128x128xbf16, #tpu.memory_space<vmem>>, vector<128x128xbf16>
    %cst = arith.constant dense<0.000000e+00> : vector<128x128xf32>
    %6 = tpu.matmul %4, %5, %cst {dimension_numbers = #tpu.dot_dimension_numbers<[1], [0], [0], [1], [0, 0, 1, 1], [], []>} : vector<128x128xbf16>, vector<128x128xbf16>, vector<128x128xf32> -> vector<128x128xf32>
    %7 = arith.addf %3, %6 : vector<128x128xf32>
    %c0_6 = arith.constant 0 : index
    %c0_7 = arith.constant 0 : index
    %8 = vector.load %arg6[%c0_6, %c0_7] : memref<128x128xf32, #tpu.memory_space<vmem>>, vector<128x128xf32>
    tpu.vector_store %arg6[%c0_6, %c0_7], %7 {strides = array<i32>} : memref<128x128xf32, #tpu.memory_space<vmem>>, vector<128x128xf32>,
    %c1_i32 = arith.constant 1 : i32
    %9 = arith.cmpi eq, %arg1, %c1_i32 : i32
    %10 = arith.extui %9 : i1 to i32
    %c0_i32_8 = arith.constant 0 : i32
    %11 = arith.cmpi ne, %10, %c0_i32_8 : i32
    scf.if %11 {
      %c0_9 = arith.constant 0 : index
      %c0_10 = arith.constant 0 : index
      %12 = vector.load %arg6[%c0_9, %c0_10] : memref<128x128xf32, #tpu.memory_space<vmem>>, vector<128x128xf32>
      %13 = tpu.iota {dimensions = array<i32: 1>} : vector<128x128xi32>
      %c32_i32 = arith.constant 32 : i32
      %14 = vector.broadcast %c32_i32 : i32 to vector<128x128xi32>
      %15 = arith.cmpi eq, %13, %14 : vector<128x128xi32>
      %cst_11 = arith.constant 0.000000e+00 : f32
      %16 = vector.broadcast %cst_11 : f32 to vector<128x128xf32>
      %17 = arith.select %15, %12, %16 : vector<128x128xi1>, vector<128x128xf32>
      %cst_12 = arith.constant dense<0.000000e+00> : vector<128xf32>
      %18 = vector.multi_reduction <add>, %17, %cst_12 [1] : vector<128x128xf32> to vector<128xf32>
      %19 = vector.shape_cast %18 : vector<128xf32> to vector<128x1xf32>
      %cst_13 = arith.constant 0.000000e+00 : f32
      %20 = vector.broadcast %cst_13 : f32 to vector<128x1xf32>
      %21 = arith.cmpf oeq, %19, %20 : vector<128x1xf32>
      %cst_14 = arith.constant 1.000000e+00 : f32
      %22 = vector.broadcast %cst_14 : f32 to vector<128x1xf32>
      %23 = arith.select %21, %22, %19 : vector<128x1xi1>, vector<128x1xf32>
      %24 = tpu.reciprocal %23 : vector<128x1xf32> -> vector<128x1xf32>
      %25 = vector.broadcast %24 : vector<128x1xf32> to vector<128x128xf32>
      %26 = arith.mulf %12, %25 : vector<128x128xf32>
      %c0_15 = arith.constant 0 : index
      %c0_16 = arith.constant 0 : index
      %27 = vector.load %arg4[%c0_15, %c0_16] : memref<128x128xf32, #tpu.memory_space<vmem>>, vector<128x128xf32>
      %28 = arith.addf %26, %27 : vector<128x128xf32>
      %c0_17 = arith.constant 0 : index
      %c0_18 = arith.constant 0 : index
      %29 = vector.load %arg5[%c0_17, %c0_18] : memref<128x128xf32, #tpu.memory_space<vmem>>, vector<128x128xf32>
      tpu.vector_store %arg5[%c0_17, %c0_18], %28 {strides = array<i32>} : memref<128x128xf32, #tpu.memory_space<vmem>>, vector<128x128xf32>,
    } else {
    }
    return
  }
  func.func @transform_0(%arg0: i32, %arg1: i32) -> (i32, i32) {
    %c0_i32 = arith.constant 0 : i32
    return %arg0, %arg1 : i32, i32
  }
  func.func @transform_1(%arg0: i32, %arg1: i32) -> (i32, i32) {
    %c0_i32 = arith.constant 0 : i32
    %c0_i32_0 = arith.constant 0 : i32
    return %arg1, %c0_i32 : i32, i32
  }
  func.func @transform_2(%arg0: i32, %arg1: i32) -> (i32, i32) {
    %c0_i32 = arith.constant 0 : i32
    %c0_i32_0 = arith.constant 0 : i32
    return %arg0, %c0_i32 : i32, i32
  }
  func.func @transform_3(%arg0: i32, %arg1: i32) -> (i32, i32) {
    %c0_i32 = arith.constant 0 : i32
    %c0_i32_0 = arith.constant 0 : i32
    return %arg0, %c0_i32 : i32, i32
  }
}

</mosaic_0001>

<llo_original>
// kernel: tpu_custom_call.1
$region0: #{tpu_custom_call.1}
  #allocation0 [shape = 'u32[]', space=smem, size = 0x4, offset = 0x4, fixed_abs, tag = 'smem constant byte address 0x4 - core index']
  #allocation1 [shape = 'u32[144,128]{1,0:T(1,128)}', space=vmem, size = 0x12000, scoped, tag = 'internal scratch']
  #allocation2 [shape = 'f32[128,128]{1,0:T(8,128)}', space=vmem, size = 0x10000, scoped, tag = 'scratch operand']
  %s0 = inlined_call_operand.hbm [shape: bf16[256,256], index: 0, kind: input, shape index: {}]
  %s1 = inlined_call_operand.hbm [shape: bf16[256,128], index: 1, kind: input, shape index: {}]
  %s2 = inlined_call_operand.hbm [shape: f32[256,128], index: 2, kind: input, shape index: {}]
  %s3 = inlined_call_operand.hbm [shape: f32[256,128], index: 3, kind: output, shape index: {}]
  %s4 = sld [smem:[#allocation0]]
  $region65: #{tpu_custom_call.1} parent=0
    _
  %s6 = ssub.s32 1, %s4
  %s7 = scalar_select 0, %s6, %s4
  $region1: #{tpu_custom_call.1} parent=0
    #allocation3 [shape = 'u8[65536]{0}', space=vmem, size = 0x10000, scoped, tag = 'input window, operand 0']
    #allocation4 [shape = 's32[2]{0}', space=sflag, size = 0x8, scoped, tag = 'scoped memory for tpu_custom_call.1']
    #allocation5 [shape = 's32[2]{0}', space=sflag, size = 0x8, scoped, tag = 'scoped memory for tpu_custom_call.1']
    #allocation6 [shape = 'u8[65536]{0}', space=vmem, size = 0x10000, scoped, tag = 'input window, operand 1']
    #allocation7 [shape = 's32[2]{0}', space=sflag, size = 0x8, scoped, tag = 'scoped memory for tpu_custom_call.1']
    #allocation8 [shape = 'u8[131072]{0}', space=vmem, size = 0x20000, scoped, tag = 'input window, operand 2']
    #allocation9 [shape = 'u8[131072]{0}', space=vmem, size = 0x20000, scoped, tag = 'output window, operand 0']
    %8 = vsyncpa [#allocation4], 0
    %s9 = scalar_lea.sflag [#allocation4], 1
    %10 = vsyncpa %s9, 0
    %11 = vsyncpa [#allocation7], 0
    %s12 = scalar_lea.sflag [#allocation7], 1
    %13 = vsyncpa %s12, 0
    %14 = vsyncpa [#allocation5], 0
    %s15 = scalar_lea.sflag [#allocation5], 1
    %16 = vsyncpa %s15, 0
    loop: start=0, step=1, limit=6
    $region2: #{tpu_custom_call.1} parent=1 // loop_pre_header
      _
    $region3: #{tpu_custom_call.1} parent=1 // loop_header
      %s18 = sphi 0, %s22
      %p19 = scmp.ge.s32.totalorder %s18, 6
      %s25 = sphi 0, %s37
      %s26 = sphi 0, %s33
      %s27 = sphi 0, %s25
      %s28 = sphi 0, %s26
      %s29 = sphi 0, %s27
      %s30 = sphi 0, %s28
      %s42 = sphi 0, %s44
      %s45 = sphi 0, %s42
      %s46 = sphi 0, %s45
      %s62 = sphi 0, %s46
      %s68 = sphi 0, %s70
      %s71 = sphi 0, %s68
      %s72 = sphi 0, %s71
      %s88 = sphi 0, %s72
      %s94 = sphi 0, %s96
      %s97 = sphi 0, %s94
      %s98 = sphi 0, %s97
      %s114 = sphi 0, %s98
      %s120 = sphi 0, %s122
      %s123 = sphi 0, %s120
      %s124 = sphi 0, %s123
      %s140 = sphi 0, %s124
    $region4: #{tpu_custom_call.1} parent=1 // loop_header_branch
      %21 = sbr.rel (%p19) target = $region8
    $region5: #{tpu_custom_call.1} parent=1 // loop_body
      %s23 = ssub.s32 %s18, 1
      %s24 = ssub.s32 %s18, 2
      %s31 = sadd.s32 1, %s26
      %p32 = scmp.ge.s32.totalorder %s31, 2
      %s33 = scalar_select %p32, 0, %s31
      %s34 = sadd.s32 1, %s25
      %s35 = scalar_select %p32, %s34, %s25
      %p36 = scmp.ge.s32.totalorder %s35, 2
      %s37 = scalar_select %p36, 0, %s35
      %s38 = ssub.s32 %s25, %s37
      %s39 = ssub.s32 %s26, %s33
      %s40 = sor.u32 %s38, %s39
      %p41 = scmp.eq.s32.totalorder %s40, 0
      %s43 = sadd.s32 %s42, 1
      %s44 = scalar_select %p41, %s42, %s43
      %p47 = pneg %p41
      %p48 = scmp.eq.s32.totalorder %s18, 3
      %p49 = por %p47, %p48
      %p50 = scmp.ne.s32.totalorder %s42, %s45
      %p51 = scmp.eq.s32.totalorder %s18, 0
      %p52 = por %p50, %p51
      %p53 = scmp.ne.s32.totalorder %s42, %s45
      %p54 = scmp.eq.s32.totalorder %s23, 3
      %p55 = por %p53, %p54
      %p56 = scmp.ne.s32.totalorder %s45, %s46
      %p57 = scmp.eq.s32.totalorder %s23, 0
      %p58 = por %p56, %p57
      %p59 = scmp.ne.s32.totalorder %s45, %s46
      %p60 = scmp.eq.s32.totalorder %s24, 3
      %p61 = por %p59, %p60
      %p63 = scmp.ne.s32.totalorder %s46, %s62
      %p64 = scmp.eq.s32.totalorder %s24, 0
      %p65 = por %p63, %p64
      %s66 = ssub.s32 %s26, %s33
      %p67 = scmp.eq.s32.totalorder %s66, 0
      %s69 = sadd.s32 %s68, 1
      %s70 = scalar_select %p67, %s68, %s69
      %p73 = pneg %p67
      %p74 = scmp.eq.s32.totalorder %s18, 3
      %p75 = por %p73, %p74
      %p76 = scmp.ne.s32.totalorder %s68, %s71
      %p77 = scmp.eq.s32.totalorder %s18, 0
      %p78 = por %p76, %p77
      %p79 = scmp.ne.s32.totalorder %s68, %s71
      %p80 = scmp.eq.s32.totalorder %s23, 3
      %p81 = por %p79, %p80
      %p82 = scmp.ne.s32.totalorder %s71, %s72
      %p83 = scmp.eq.s32.totalorder %s23, 0
      %p84 = por %p82, %p83
      %p85 = scmp.ne.s32.totalorder %s71, %s72
      %p86 = scmp.eq.s32.totalorder %s24, 3
      %p87 = por %p85, %p86
      %p89 = scmp.ne.s32.totalorder %s72, %s88
      %p90 = scmp.eq.s32.totalorder %s24, 0
      %p91 = por %p89, %p90
      %s92 = ssub.s32 %s25, %s37
      %p93 = scmp.eq.s32.totalorder %s92, 0
      %s95 = sadd.s32 %s94, 1
      %s96 = scalar_select %p93, %s94, %s95
      %p99 = pneg %p93
      %p100 = scmp.eq.s32.totalorder %s18, 3
      %p101 = por %p99, %p100
      %p102 = scmp.ne.s32.totalorder %s94, %s97
      %p103 = scmp.eq.s32.totalorder %s18, 0
      %p104 = por %p102, %p103
      %p105 = scmp.ne.s32.totalorder %s94, %s97
      %p106 = scmp.eq.s32.totalorder %s23, 3
      %p107 = por %p105, %p106
      %p108 = scmp.ne.s32.totalorder %s97, %s98
      %p109 = scmp.eq.s32.totalorder %s23, 0
      %p110 = por %p108, %p109
      %p111 = scmp.ne.s32.totalorder %s97, %s98
      %p112 = scmp.eq.s32.totalorder %s24, 3
      %p113 = por %p111, %p112
      %p115 = scmp.ne.s32.totalorder %s98, %s114
      %p116 = scmp.eq.s32.totalorder %s24, 0
      %p117 = por %p115, %p116
      %s118 = ssub.s32 %s25, %s37
      %p119 = scmp.eq.s32.totalorder %s118, 0
      %s121 = sadd.s32 %s120, 1
      %s122 = scalar_select %p119, %s120, %s121
      %p125 = pneg %p119
      %p126 = scmp.eq.s32.totalorder %s18, 3
      %p127 = por %p125, %p126
      %p128 = scmp.ne.s32.totalorder %s120, %s123
      %p129 = scmp.eq.s32.totalorder %s18, 0
      %p130 = por %p128, %p129
      %p131 = scmp.ne.s32.totalorder %s120, %s123
      %p132 = scmp.eq.s32.totalorder %s23, 3
      %p133 = por %p131, %p132
      %p134 = scmp.ne.s32.totalorder %s123, %s124
      %p135 = scmp.eq.s32.totalorder %s23, 0
      %p136 = por %p134, %p135
      %p137 = scmp.ne.s32.totalorder %s123, %s124
      %p138 = scmp.eq.s32.totalorder %s24, 3
      %p139 = por %p137, %p138
      %p141 = scmp.ne.s32.totalorder %s124, %s140
      %p142 = scmp.eq.s32.totalorder %s24, 0
      %p143 = por %p141, %p142
      %p144 = scmp.le.s32.totalorder 1, %s18
      %p145 = scmp.lt.s32.totalorder %s18, 5
      %p146 = pnand %p144, %p145
      %p147 = pneg %p146
      // Predicated region
      $region9: #{tpu_custom_call.1} parent=5 // pred_check
        _
      $region10: #{tpu_custom_call.1} parent=5 // pred_check_branch
        %149 = sbr.rel (%p146) target = $region12
      $region11: #{tpu_custom_call.1} parent=5 // pred_region
        %s150 = ssub.s32 %s18, 1
      $region12: #{tpu_custom_call.1} parent=5 // pred_fallthru
        _
      %p151 = scmp.lt.s32.totalorder %s18, 4
      // Predicated region
      $region13: #{tpu_custom_call.1} parent=5 // pred_check
        %p152 = pneg %p151
      $region14: #{tpu_custom_call.1} parent=5 // pred_check_branch
        %154 = sbr.rel (%p152) target = $region16
      $region15: #{tpu_custom_call.1} parent=5 // pred_region
        // Predicated region
        $region17: #{tpu_custom_call.1} parent=15 // pred_check
          %p155 = pneg %p52
        $region18: #{tpu_custom_call.1} parent=15 // pred_check_branch
          %157 = sbr.rel (%p155) target = $region20
        $region19: #{tpu_custom_call.1} parent=15 // pred_region
          %s158 = sand.u32 %s42, 1
          %s159 = scalar_lea.sflag [#allocation4], %s158
          %s160 = sand.u32 %s42, 1
          %s161 = smul.addr %s160, 64
          %s162 = scalar_lea.vmem [#allocation3], %s161
          %s163 = smul.u32 16, %s25
          %s165 = ssub.s32 1024, 1024
          %166 = vsyncadd %s159, %s165
          %s167 = smul.addr %s163, 2
          %s168 = sadd.s32 %s26, %s167
          %s169 = smul.addr %s168, 64
          %s170 = scalar_lea.hbm %s0, %s169
          %s171 = sshll.u32 %s162, 4
          %s172 = int_to_ptr.vmem [resolvable:$true] %s171
          %177 = dma.hbm_to_vmem [thread:$0]  %s170, 1024, %s172, %s159, 128, 64, 4
        $region20: #{tpu_custom_call.1} parent=15 // pred_fallthru
          _
        // Predicated region
        $region21: #{tpu_custom_call.1} parent=15 // pred_check
          %p178 = pneg %p78
        $region22: #{tpu_custom_call.1} parent=15 // pred_check_branch
          %180 = sbr.rel (%p178) target = $region24
        $region23: #{tpu_custom_call.1} parent=15 // pred_region
          %s181 = sand.u32 %s18, 1
          %s182 = scalar_lea.sflag [#allocation7], %s181
          %s183 = sand.u32 %s68, 1
          %s184 = smul.addr %s183, 64
          %s185 = scalar_lea.vmem [#allocation6], %s184
          %s186 = smul.u32 16, %s26
          %s188 = ssub.s32 1024, 1024
          %189 = vsyncadd %s182, %s188
          %s190 = smul.addr %s186, 64
          %s191 = scalar_lea.hbm %s1, %s190
          %s192 = sshll.u32 %s185, 4
          %s193 = int_to_ptr.vmem [resolvable:$true] %s192
          %198 = dma.hbm_to_vmem [thread:$0]  %s191, 1024, %s193, %s182, 64, 64, 4
        $region24: #{tpu_custom_call.1} parent=15 // pred_fallthru
          _
        // Predicated region
        $region25: #{tpu_custom_call.1} parent=15 // pred_check
          %p199 = pneg %p104
        $region26: #{tpu_custom_call.1} parent=15 // pred_check_branch
          %201 = sbr.rel (%p199) target = $region28
        $region27: #{tpu_custom_call.1} parent=15 // pred_region
          %s202 = sand.u32 %s18, 1
          %s203 = scalar_lea.sflag [#allocation7], %s202
          %s204 = sand.u32 %s94, 1
          %s205 = smul.addr %s204, 128
          %s206 = scalar_lea.vmem [#allocation8], %s205
          %s207 = smul.u32 16, %s25
          %s209 = ssub.s32 2048, 2048
          %210 = vsyncadd %s203, %s209
          %s211 = smul.addr %s207, 128
          %s212 = scalar_lea.hbm %s2, %s211
          %s213 = sshll.u32 %s206, 4
          %s214 = int_to_ptr.vmem [resolvable:$true] %s213
          %219 = dma.hbm_to_vmem [thread:$0]  %s212, 2048, %s214, %s203, 128, 128, 8
        $region28: #{tpu_custom_call.1} parent=15 // pred_fallthru
          _
      $region16: #{tpu_custom_call.1} parent=5 // pred_fallthru
        _
      %p220 = scmp.le.s32.totalorder 1, %s18
      %p221 = scmp.lt.s32.totalorder %s18, 5
      %p222 = pnand %p220, %p221
      %p223 = pneg %p222
      // Predicated region
      $region29: #{tpu_custom_call.1} parent=5 // pred_check
        _
      $region30: #{tpu_custom_call.1} parent=5 // pred_check_branch
        %225 = sbr.rel (%p222) target = $region32
      $region31: #{tpu_custom_call.1} parent=5 // pred_region
        %s226 = ssub.s32 %s18, 1
        %s227 = sand.u32 %s45, 1
        %s228 = scalar_lea.sflag [#allocation4], %s227
        %s229 = sand.u32 %s45, 1
        %s230 = smul.addr %s229, 64
        %s231 = scalar_lea.vmem [#allocation3], %s230
        // Predicated region
        $region33: #{tpu_custom_call.1} parent=31 // pred_check
          %p232 = pneg %p58
        $region34: #{tpu_custom_call.1} parent=31 // pred_check_branch
          %234 = sbr.rel (%p232) target = $region36
        $region35: #{tpu_custom_call.1} parent=31 // pred_region
          %235 = dma.done %s228, 1024
        $region36: #{tpu_custom_call.1} parent=31 // pred_fallthru
          _
        %s236 = sand.u32 %s23, 1
        %s237 = scalar_lea.sflag [#allocation7], %s236
        %s238 = sand.u32 %s71, 1
        %s239 = smul.addr %s238, 64
        %s240 = scalar_lea.vmem [#allocation6], %s239
        // Predicated region
        $region37: #{tpu_custom_call.1} parent=31 // pred_check
          %p241 = pneg %p84
        $region38: #{tpu_custom_call.1} parent=31 // pred_check_branch
          %243 = sbr.rel (%p241) target = $region40
        $region39: #{tpu_custom_call.1} parent=31 // pred_region
          %244 = dma.done %s237, 1024
        $region40: #{tpu_custom_call.1} parent=31 // pred_fallthru
          _
        %s245 = sand.u32 %s23, 1
        %s246 = scalar_lea.sflag [#allocation7], %s245
        %s247 = sand.u32 %s97, 1
        %s248 = smul.addr %s247, 128
        %s249 = scalar_lea.vmem [#allocation8], %s248
        // Predicated region
        $region41: #{tpu_custom_call.1} parent=31 // pred_check
          %p250 = pneg %p110
        $region42: #{tpu_custom_call.1} parent=31 // pred_check_branch
          %252 = sbr.rel (%p250) target = $region44
        $region43: #{tpu_custom_call.1} parent=31 // pred_region
          %253 = dma.done %s246, 2048
        $region44: #{tpu_custom_call.1} parent=31 // pred_fallthru
          _
        %s254 = sand.u32 %s45, 1
        %s255 = scalar_lea.sflag [#allocation4], %s254
        %s256 = sand.u32 %s45, 1
        %s257 = smul.addr %s256, 64
        %s258 = scalar_lea.vmem [#allocation3], %s257
        %p259 = pneg %p58
        %p260 = pneg %p55
        %s261 = sand.u32 %s23, 1
        %s262 = scalar_lea.sflag [#allocation7], %s261
        %s263 = sand.u32 %s71, 1
        %s264 = smul.addr %s263, 64
        %s265 = scalar_lea.vmem [#allocation6], %s264
        %p266 = pneg %p84
        %p267 = pneg %p81
        %s268 = sand.u32 %s23, 1
        %s269 = scalar_lea.sflag [#allocation7], %s268
        %s270 = sand.u32 %s97, 1
        %s271 = smul.addr %s270, 128
        %s272 = scalar_lea.vmem [#allocation8], %s271
        %p273 = pneg %p110
        %p274 = pneg %p107
        %p275 = pneg %p136
        %p276 = pneg %p133
        %s277 = sand.u32 %s123, 1
        %s278 = scalar_lea.sflag [#allocation5], %s277
        %s279 = sand.u32 %s123, 1
        %s280 = smul.addr %s279, 128
        %s281 = scalar_lea.vmem [#allocation9], %s280
        %s282 = smul.u32 16, %s27
        %s283 = smul.u32 16, %s28
        %s284 = smul.u32 16, %s27
        %s285 = smul.u32 16, %s27
        %p287 = scmp.eq.s32.totalorder %s28, 0
        // Predicated region
        $region45: #{tpu_custom_call.1} parent=31 // pred_check
          %p288 = pneg %p287
        $region46: #{tpu_custom_call.1} parent=31 // pred_check_branch
          %290 = sbr.rel (%p288) target = $region48
        $region47: #{tpu_custom_call.1} parent=31 // pred_region
          %291 = vst [vmem:[#allocation2] sm:$0xff] 0.0
          %292 = vst [vmem:[#allocation2 + $0x8] sm:$0xff] 0.0
          %293 = vst [vmem:[#allocation2 + $0x10] sm:$0xff] 0.0
          %294 = vst [vmem:[#allocation2 + $0x18] sm:$0xff] 0.0
          %295 = vst [vmem:[#allocation2 + $0x20] sm:$0xff] 0.0
          %296 = vst [vmem:[#allocation2 + $0x28] sm:$0xff] 0.0
          %297 = vst [vmem:[#allocation2 + $0x30] sm:$0xff] 0.0
          %298 = vst [vmem:[#allocation2 + $0x38] sm:$0xff] 0.0
          %299 = vst [vmem:[#allocation2 + $0x40] sm:$0xff] 0.0
          %300 = vst [vmem:[#allocation2 + $0x48] sm:$0xff] 0.0
          %301 = vst [vmem:[#allocation2 + $0x50] sm:$0xff] 0.0
          %302 = vst [vmem:[#allocation2 + $0x58] sm:$0xff] 0.0
          %303 = vst [vmem:[#allocation2 + $0x60] sm:$0xff] 0.0
          %304 = vst [vmem:[#allocation2 + $0x68] sm:$0xff] 0.0
          %305 = vst [vmem:[#allocation2 + $0x70] sm:$0xff] 0.0
          %306 = vst [vmem:[#allocation2 + $0x78] sm:$0xff] 0.0
        $region48: #{tpu_custom_call.1} parent=31 // pred_fallthru
          _
        %v307 = vld [vmem:[#allocation2] sm:$0xff]
        %v308 = vld [vmem:[#allocation2 + $0x8] sm:$0xff]
        %v309 = vld [vmem:[#allocation2 + $0x10] sm:$0xff]
        %v310 = vld [vmem:[#allocation2 + $0x18] sm:$0xff]
        %v311 = vld [vmem:[#allocation2 + $0x20] sm:$0xff]
        %v312 = vld [vmem:[#allocation2 + $0x28] sm:$0xff]
        %v313 = vld [vmem:[#allocation2 + $0x30] sm:$0xff]
        %v314 = vld [vmem:[#allocation2 + $0x38] sm:$0xff]
        %v315 = vld [vmem:[#allocation2 + $0x40] sm:$0xff]
        %v316 = vld [vmem:[#allocation2 + $0x48] sm:$0xff]
        %v317 = vld [vmem:[#allocation2 + $0x50] sm:$0xff]
        %v318 = vld [vmem:[#allocation2 + $0x58] sm:$0xff]
        %v319 = vld [vmem:[#allocation2 + $0x60] sm:$0xff]
        %v320 = vld [vmem:[#allocation2 + $0x68] sm:$0xff]
        %v321 = vld [vmem:[#allocation2 + $0x70] sm:$0xff]
        %v322 = vld [vmem:[#allocation2 + $0x78] sm:$0xff]
        %v323 = vld [vmem:[%s231] sm:$0xf]
        %v324 = vld [vmem:[%s231 + $0x4] sm:$0xf]
        %v325 = vld [vmem:[%s231 + $0x8] sm:$0xf]
        %v326 = vld [vmem:[%s231 + $0xc] sm:$0xf]
        %v327 = vld [vmem:[%s231 + $0x10] sm:$0xf]
        %v328 = vld [vmem:[%s231 + $0x14] sm:$0xf]
        %v329 = vld [vmem:[%s231 + $0x18] sm:$0xf]
        %v330 = vld [vmem:[%s231 + $0x1c] sm:$0xf]
        %v331 = vld [vmem:[%s231 + $0x20] sm:$0xf]
        %v332 = vld [vmem:[%s231 + $0x24] sm:$0xf]
        %v333 = vld [vmem:[%s231 + $0x28] sm:$0xf]
        %v334 = vld [vmem:[%s231 + $0x2c] sm:$0xf]
        %v335 = vld [vmem:[%s231 + $0x30] sm:$0xf]
        %v336 = vld [vmem:[%s231 + $0x34] sm:$0xf]
        %v337 = vld [vmem:[%s231 + $0x38] sm:$0xf]
        %v338 = vld [vmem:[%s231 + $0x3c] sm:$0xf]
        %v339 = vld [vmem:[%s240] sm:$0xf]
        %v340 = vld [vmem:[%s240 + $0x4] sm:$0xf]
        %v341 = vld [vmem:[%s240 + $0x8] sm:$0xf]
        %v342 = vld [vmem:[%s240 + $0xc] sm:$0xf]
        %v343 = vld [vmem:[%s240 + $0x10] sm:$0xf]
        %v344 = vld [vmem:[%s240 + $0x14] sm:$0xf]
        %v345 = vld [vmem:[%s240 + $0x18] sm:$0xf]
        %v346 = vld [vmem:[%s240 + $0x1c] sm:$0xf]
        %v347 = vld [vmem:[%s240 + $0x20] sm:$0xf]
        %v348 = vld [vmem:[%s240 + $0x24] sm:$0xf]
        %v349 = vld [vmem:[%s240 + $0x28] sm:$0xf]
        %v350 = vld [vmem:[%s240 + $0x2c] sm:$0xf]
        %v351 = vld [vmem:[%s240 + $0x30] sm:$0xf]
        %v352 = vld [vmem:[%s240 + $0x34] sm:$0xf]
        %v353 = vld [vmem:[%s240 + $0x38] sm:$0xf]
        %v354 = vld [vmem:[%s240 + $0x3c] sm:$0xf]
        %v371 = vunpack.c.l.b16 %v323
        %v372 = vunpack.c.l.b16 %v324
        %v373 = vunpack.c.l.b16 %v325
        %v374 = vunpack.c.l.b16 %v326
        %v375 = vunpack.c.l.b16 %v327
        %v376 = vunpack.c.l.b16 %v328
        %v377 = vunpack.c.l.b16 %v329
        %v378 = vunpack.c.l.b16 %v330
        %v379 = vunpack.c.l.b16 %v331
        %v380 = vunpack.c.l.b16 %v332
        %v381 = vunpack.c.l.b16 %v333
        %v382 = vunpack.c.l.b16 %v334
        %v383 = vunpack.c.l.b16 %v335
        %v384 = vunpack.c.l.b16 %v336
        %v385 = vunpack.c.l.b16 %v337
        %v386 = vunpack.c.l.b16 %v338
        %v387 = vpack.c.b16 %v372, %v371
        %v388 = vpack.c.b16 %v374, %v373
        %v389 = vpack.c.b16 %v376, %v375
        %v390 = vpack.c.b16 %v378, %v377
        %v391 = vpack.c.b16 %v380, %v379
        %v392 = vpack.c.b16 %v382, %v381
        %v393 = vpack.c.b16 %v384, %v383
        %v394 = vpack.c.b16 %v386, %v385
        %v419 = vunpack.c.l.b16 %v339
        %v420 = vunpack.c.l.b16 %v340
        %v421 = vunpack.c.l.b16 %v341
        %v422 = vunpack.c.l.b16 %v342
        %v423 = vunpack.c.l.b16 %v343
        %v424 = vunpack.c.l.b16 %v344
        %v425 = vunpack.c.l.b16 %v345
        %v426 = vunpack.c.l.b16 %v346
        %v427 = vunpack.c.l.b16 %v347
        %v428 = vunpack.c.l.b16 %v348
        %v429 = vunpack.c.l.b16 %v349
        %v430 = vunpack.c.l.b16 %v350
        %v431 = vunpack.c.l.b16 %v351
        %v432 = vunpack.c.l.b16 %v352
        %v433 = vunpack.c.l.b16 %v353
        %v434 = vunpack.c.l.b16 %v354
        %v435 = vpack.c.b16 %v420, %v419
        %v436 = vpack.c.b16 %v422, %v421
        %v437 = vpack.c.b16 %v424, %v423
        %v438 = vpack.c.b16 %v426, %v425
        %v439 = vpack.c.b16 %v428, %v427
        %v440 = vpack.c.b16 %v430, %v429
        %v441 = vpack.c.b16 %v432, %v431
        %v442 = vpack.c.b16 %v434, %v433
        %451 = vmatprep.subr.bf16.mxu0 0
        %452 = vmatpush1.bf16.msra.mxu0 %v435
        %453 = vmatprep.subr.bf16.mxu0 0
        %454 = vmatpush1.bf16.msra.mxu0 %v436
        %455 = vmatprep.subr.bf16.mxu0 0
        %456 = vmatpush1.bf16.msra.mxu0 %v437
        %457 = vmatprep.subr.bf16.mxu0 0
        %458 = vmatpush1.bf16.msra.mxu0 %v438
        %459 = vmatprep.subr.bf16.mxu0 0
        %460 = vmatpush1.bf16.msra.mxu0 %v439
        %461 = vmatprep.subr.bf16.mxu0 0
        %462 = vmatpush1.bf16.msra.mxu0 %v440
        %463 = vmatprep.subr.bf16.mxu0 0
        %464 = vmatpush1.bf16.msra.mxu0 %v441
        %465 = vmatprep.subr.bf16.mxu0 0
        %466 = vmatpush1.bf16.msra.mxu0 %v442
        %467 = vmatprep.subr.bf16.mxu0 0
        %468 = vmatpush1.bf16.msra.mxu0 0
        %469 = vmatprep.subr.bf16.mxu0 0
        %470 = vmatpush1.bf16.msra.mxu0 0
        %471 = vmatprep.subr.bf16.mxu0 0
        %472 = vmatpush1.bf16.msra.mxu0 0
        %473 = vmatprep.subr.bf16.mxu0 0
        %474 = vmatpush1.bf16.msra.mxu0 0
        %475 = vmatprep.subr.bf16.mxu0 0
        %476 = vmatpush1.bf16.msra.mxu0 0
        %477 = vmatprep.subr.bf16.mxu0 0
        %478 = vmatpush1.bf16.msra.mxu0 0
        %479 = vmatprep.subr.bf16.mxu0 0
        %480 = vmatpush1.bf16.msra.mxu0 0
        %481 = vmatprep.subr.bf16.mxu0 0
        %482 = vmatpush1.bf16.msra.mxu0 0
        %483 = vmatprep.mubr.bf16.mxu0 0
        %484 = vmatmul.mubr.bf16.gmra.mrb[0].mxu0 %v387
        %v485 = vpop.f32.mrb[0].mxu0
        %v486 = vadd.f32 0.0, %v485
        %v487 = vpop.f32.mrb[0].mxu0
        %v488 = vpop.f32.mrb[0].mxu0
        %v489 = vadd.f32 0.0, %v488
        %v490 = vpop.f32.mrb[0].mxu0
        %491 = vmatprep.mubr.bf16.mxu0 0
        %492 = vmatmul.mubr.bf16.gmra.mrb[0].mxu0 %v388
        %v493 = vpop.f32.mrb[0].mxu0
        %v494 = vadd.f32 0.0, %v493
        %v495 = vpop.f32.mrb[0].mxu0
        %v496 = vpop.f32.mrb[0].mxu0
        %v497 = vadd.f32 0.0, %v496
        %v498 = vpop.f32.mrb[0].mxu0
        %499 = vmatprep.mubr.bf16.mxu0 0
        %500 = vmatmul.mubr.bf16.gmra.mrb[0].mxu0 %v389
        %v501 = vpop.f32.mrb[0].mxu0
        %v502 = vadd.f32 0.0, %v501
        %v503 = vpop.f32.mrb[0].mxu0
        %v504 = vpop.f32.mrb[0].mxu0
        %v505 = vadd.f32 0.0, %v504
        %v506 = vpop.f32.mrb[0].mxu0
        %507 = vmatprep.mubr.bf16.mxu0 0
        %508 = vmatmul.mubr.bf16.gmra.mrb[0].mxu0 %v390
        %v509 = vpop.f32.mrb[0].mxu0
        %v510 = vadd.f32 0.0, %v509
        %v511 = vpop.f32.mrb[0].mxu0
        %v512 = vpop.f32.mrb[0].mxu0
        %v513 = vadd.f32 0.0, %v512
        %v514 = vpop.f32.mrb[0].mxu0
        %515 = vmatprep.mubr.bf16.mxu0 0
        %516 = vmatmul.mubr.bf16.gmra.mrb[0].mxu0 %v391
        %v517 = vpop.f32.mrb[0].mxu0
        %v518 = vadd.f32 0.0, %v517
        %v519 = vpop.f32.mrb[0].mxu0
        %v520 = vpop.f32.mrb[0].mxu0
        %v521 = vadd.f32 0.0, %v520
        %v522 = vpop.f32.mrb[0].mxu0
        %523 = vmatprep.mubr.bf16.mxu0 0
        %524 = vmatmul.mubr.bf16.gmra.mrb[0].mxu0 %v392
        %v525 = vpop.f32.mrb[0].mxu0
        %v526 = vadd.f32 0.0, %v525
        %v527 = vpop.f32.mrb[0].mxu0
        %v528 = vpop.f32.mrb[0].mxu0
        %v529 = vadd.f32 0.0, %v528
        %v530 = vpop.f32.mrb[0].mxu0
        %531 = vmatprep.mubr.bf16.mxu0 0
        %532 = vmatmul.mubr.bf16.gmra.mrb[0].mxu0 %v393
        %v533 = vpop.f32.mrb[0].mxu0
        %v534 = vadd.f32 0.0, %v533
        %v535 = vpop.f32.mrb[0].mxu0
        %v536 = vpop.f32.mrb[0].mxu0
        %v537 = vadd.f32 0.0, %v536
        %v538 = vpop.f32.mrb[0].mxu0
        %539 = vmatprep.mubr.bf16.mxu0 0
        %540 = vmatmul.mubr.bf16.gmra.mrb[0].mxu0 %v394
        %v541 = vpop.f32.mrb[0].mxu0
        %v542 = vadd.f32 0.0, %v541
        %v543 = vpop.f32.mrb[0].mxu0
        %v544 = vpop.f32.mrb[0].mxu0
        %v545 = vadd.f32 0.0, %v544
        %v546 = vpop.f32.mrb[0].mxu0
        %547 = vdwg.mxu0
        %v548 = vadd.f32 %v307, %v486
        %v549 = vadd.f32 %v308, %v489
        %v550 = vadd.f32 %v309, %v494
        %v551 = vadd.f32 %v310, %v497
        %v552 = vadd.f32 %v311, %v502
        %v553 = vadd.f32 %v312, %v505
        %v554 = vadd.f32 %v313, %v510
        %v555 = vadd.f32 %v314, %v513
        %v556 = vadd.f32 %v315, %v518
        %v557 = vadd.f32 %v316, %v521
        %v558 = vadd.f32 %v317, %v526
        %v559 = vadd.f32 %v318, %v529
        %v560 = vadd.f32 %v319, %v534
        %v561 = vadd.f32 %v320, %v537
        %v562 = vadd.f32 %v321, %v542
        %v563 = vadd.f32 %v322, %v545
        %564 = vst [vmem:[#allocation2] sm:$0xff] %v548
        %565 = vst [vmem:[#allocation2 + $0x8] sm:$0xff] %v549
        %566 = vst [vmem:[#allocation2 + $0x10] sm:$0xff] %v550
        %567 = vst [vmem:[#allocation2 + $0x18] sm:$0xff] %v551
        %568 = vst [vmem:[#allocation2 + $0x20] sm:$0xff] %v552
        %569 = vst [vmem:[#allocation2 + $0x28] sm:$0xff] %v553
        %570 = vst [vmem:[#allocation2 + $0x30] sm:$0xff] %v554
        %571 = vst [vmem:[#allocation2 + $0x38] sm:$0xff] %v555
        %572 = vst [vmem:[#allocation2 + $0x40] sm:$0xff] %v556
        %573 = vst [vmem:[#allocation2 + $0x48] sm:$0xff] %v557
        %574 = vst [vmem:[#allocation2 + $0x50] sm:$0xff] %v558
        %575 = vst [vmem:[#allocation2 + $0x58] sm:$0xff] %v559
        %576 = vst [vmem:[#allocation2 + $0x60] sm:$0xff] %v560
        %577 = vst [vmem:[#allocation2 + $0x68] sm:$0xff] %v561
        %578 = vst [vmem:[#allocation2 + $0x70] sm:$0xff] %v562
        %579 = vst [vmem:[#allocation2 + $0x78] sm:$0xff] %v563
        %p580 = scmp.eq.s32.totalorder %s28, 1
        // Predicated region
        $region49: #{tpu_custom_call.1} parent=31 // pred_check
          %p581 = pneg %p580
        $region50: #{tpu_custom_call.1} parent=31 // pred_check_branch
          %583 = sbr.rel (%p581) target = $region52
        $region51: #{tpu_custom_call.1} parent=31 // pred_region
          %v584 = vld [vmem:[#allocation2] sm:$0xff]
          %v585 = vld [vmem:[#allocation2 + $0x8] sm:$0xff]
          %v586 = vld [vmem:[#allocation2 + $0x10] sm:$0xff]
          %v587 = vld [vmem:[#allocation2 + $0x18] sm:$0xff]
          %v588 = vld [vmem:[#allocation2 + $0x20] sm:$0xff]
          %v589 = vld [vmem:[#allocation2 + $0x28] sm:$0xff]
          %v590 = vld [vmem:[#allocation2 + $0x30] sm:$0xff]
          %v591 = vld [vmem:[#allocation2 + $0x38] sm:$0xff]
          %v592 = vld [vmem:[#allocation2 + $0x40] sm:$0xff]
          %v593 = vld [vmem:[#allocation2 + $0x48] sm:$0xff]
          %v594 = vld [vmem:[#allocation2 + $0x50] sm:$0xff]
          %v595 = vld [vmem:[#allocation2 + $0x58] sm:$0xff]
          %v596 = vld [vmem:[#allocation2 + $0x60] sm:$0xff]
          %v597 = vld [vmem:[#allocation2 + $0x68] sm:$0xff]
          %v598 = vld [vmem:[#allocation2 + $0x70] sm:$0xff]
          %v599 = vld [vmem:[#allocation2 + $0x78] sm:$0xff]
          %v600 = vlaneseq
          %v601 = vand.u32 %v600, 127
          %vm602 = vcmp.eq.s32.totalorder %v601, 32
          %v603 = vsel %vm602, %v584, 0.0
          %v604 = vsel %vm602, %v585, 0.0
          %v605 = vsel %vm602, %v586, 0.0
          %v606 = vsel %vm602, %v587, 0.0
          %v607 = vsel %vm602, %v588, 0.0
          %v608 = vsel %vm602, %v589, 0.0
          %v609 = vsel %vm602, %v590, 0.0
          %v610 = vsel %vm602, %v591, 0.0
          %v611 = vsel %vm602, %v592, 0.0
          %v612 = vsel %vm602, %v593, 0.0
          %v613 = vsel %vm602, %v594, 0.0
          %v614 = vsel %vm602, %v595, 0.0
          %v615 = vsel %vm602, %v596, 0.0
          %v616 = vsel %vm602, %v597, 0.0
          %v617 = vsel %vm602, %v598, 0.0
          %v618 = vsel %vm602, %v599, 0.0
          %619 = vadd.xlane.f32.xlu0 %v603
          %v620 = vpop.xlane.xlu0 %619
          %621 = vadd.xlane.f32.xlu0 %v604
          %v622 = vpop.xlane.xlu0 %621
          %623 = vadd.xlane.f32.xlu0 %v605
          %v624 = vpop.xlane.xlu0 %623
          %625 = vadd.xlane.f32.xlu0 %v606
          %v626 = vpop.xlane.xlu0 %625
          %627 = vadd.xlane.f32.xlu0 %v607
          %v628 = vpop.xlane.xlu0 %627
          %629 = vadd.xlane.f32.xlu0 %v608
          %v630 = vpop.xlane.xlu0 %629
          %631 = vadd.xlane.f32.xlu0 %v609
          %v632 = vpop.xlane.xlu0 %631
          %633 = vadd.xlane.f32.xlu0 %v610
          %v634 = vpop.xlane.xlu0 %633
          %635 = vadd.xlane.f32.xlu0 %v611
          %v636 = vpop.xlane.xlu0 %635
          %637 = vadd.xlane.f32.xlu0 %v612
          %v638 = vpop.xlane.xlu0 %637
          %639 = vadd.xlane.f32.xlu0 %v613
          %v640 = vpop.xlane.xlu0 %639
          %641 = vadd.xlane.f32.xlu0 %v614
          %v642 = vpop.xlane.xlu0 %641
          %643 = vadd.xlane.f32.xlu0 %v615
          %v644 = vpop.xlane.xlu0 %643
          %645 = vadd.xlane.f32.xlu0 %v616
          %v646 = vpop.xlane.xlu0 %645
          %647 = vadd.xlane.f32.xlu0 %v617
          %v648 = vpop.xlane.xlu0 %647
          %649 = vadd.xlane.f32.xlu0 %v618
          %v650 = vpop.xlane.xlu0 %649
          %vm651 = vcmp.eq.f32.partialorder %v620, 0.0
          %vm652 = vcmp.eq.f32.partialorder %v622, 0.0
          %vm653 = vcmp.eq.f32.partialorder %v624, 0.0
          %vm654 = vcmp.eq.f32.partialorder %v626, 0.0
          %vm655 = vcmp.eq.f32.partialorder %v628, 0.0
          %vm656 = vcmp.eq.f32.partialorder %v630, 0.0
          %vm657 = vcmp.eq.f32.partialorder %v632, 0.0
          %vm658 = vcmp.eq.f32.partialorder %v634, 0.0
          %vm659 = vcmp.eq.f32.partialorder %v636, 0.0
          %vm660 = vcmp.eq.f32.partialorder %v638, 0.0
          %vm661 = vcmp.eq.f32.partialorder %v640, 0.0
          %vm662 = vcmp.eq.f32.partialorder %v642, 0.0
          %vm663 = vcmp.eq.f32.partialorder %v644, 0.0
          %vm664 = vcmp.eq.f32.partialorder %v646, 0.0
          %vm665 = vcmp.eq.f32.partialorder %v648, 0.0
          %vm666 = vcmp.eq.f32.partialorder %v650, 0.0
          %v667 = vsel %vm651, 1.0, %v620
          %v668 = vsel %vm652, 1.0, %v622
          %v669 = vsel %vm653, 1.0, %v624
          %v670 = vsel %vm654, 1.0, %v626
          %v671 = vsel %vm655, 1.0, %v628
          %v672 = vsel %vm656, 1.0, %v630
          %v673 = vsel %vm657, 1.0, %v632
          %v674 = vsel %vm658, 1.0, %v634
          %v675 = vsel %vm659, 1.0, %v636
          %v676 = vsel %vm660, 1.0, %v638
          %v677 = vsel %vm661, 1.0, %v640
          %v678 = vsel %vm662, 1.0, %v642
          %v679 = vsel %vm663, 1.0, %v644
          %v680 = vsel %vm664, 1.0, %v646
          %v681 = vsel %vm665, 1.0, %v648
          %v682 = vsel %vm666, 1.0, %v650
          %v683 = vrcp.pop %v667
          %v684 = vrcp.pop %v668
          %v685 = vrcp.pop %v669
          %v686 = vrcp.pop %v670
          %v687 = vrcp.pop %v671
          %v688 = vrcp.pop %v672
          %v689 = vrcp.pop %v673
          %v690 = vrcp.pop %v674
          %v691 = vrcp.pop %v675
          %v692 = vrcp.pop %v676
          %v693 = vrcp.pop %v677
          %v694 = vrcp.pop %v678
          %v695 = vrcp.pop %v679
          %v696 = vrcp.pop %v680
          %v697 = vrcp.pop %v681
          %v698 = vrcp.pop %v682
          %v699 = vmul.f32 %v584, %v683
          %v700 = vmul.f32 %v585, %v684
          %v701 = vmul.f32 %v586, %v685
          %v702 = vmul.f32 %v587, %v686
          %v703 = vmul.f32 %v588, %v687
          %v704 = vmul.f32 %v589, %v688
          %v705 = vmul.f32 %v590, %v689
          %v706 = vmul.f32 %v591, %v690
          %v707 = vmul.f32 %v592, %v691
          %v708 = vmul.f32 %v593, %v692
          %v709 = vmul.f32 %v594, %v693
          %v710 = vmul.f32 %v595, %v694
          %v711 = vmul.f32 %v596, %v695
          %v712 = vmul.f32 %v597, %v696
          %v713 = vmul.f32 %v598, %v697
          %v714 = vmul.f32 %v599, %v698
          %v715 = vld [vmem:[%s249] sm:$0xff]
          %v716 = vld [vmem:[%s249 + $0x8] sm:$0xff]
          %v717 = vld [vmem:[%s249 + $0x10] sm:$0xff]
          %v718 = vld [vmem:[%s249 + $0x18] sm:$0xff]
          %v719 = vld [vmem:[%s249 + $0x20] sm:$0xff]
          %v720 = vld [vmem:[%s249 + $0x28] sm:$0xff]
          %v721 = vld [vmem:[%s249 + $0x30] sm:$0xff]
          %v722 = vld [vmem:[%s249 + $0x38] sm:$0xff]
          %v723 = vld [vmem:[%s249 + $0x40] sm:$0xff]
          %v724 = vld [vmem:[%s249 + $0x48] sm:$0xff]
          %v725 = vld [vmem:[%s249 + $0x50] sm:$0xff]
          %v726 = vld [vmem:[%s249 + $0x58] sm:$0xff]
          %v727 = vld [vmem:[%s249 + $0x60] sm:$0xff]
          %v728 = vld [vmem:[%s249 + $0x68] sm:$0xff]
          %v729 = vld [vmem:[%s249 + $0x70] sm:$0xff]
          %v730 = vld [vmem:[%s249 + $0x78] sm:$0xff]
          %v731 = vadd.f32 %v699, %v715
          %v732 = vadd.f32 %v700, %v716
          %v733 = vadd.f32 %v701, %v717
          %v734 = vadd.f32 %v702, %v718
          %v735 = vadd.f32 %v703, %v719
          %v736 = vadd.f32 %v704, %v720
          %v737 = vadd.f32 %v705, %v721
          %v738 = vadd.f32 %v706, %v722
          %v739 = vadd.f32 %v707, %v723
          %v740 = vadd.f32 %v708, %v724
          %v741 = vadd.f32 %v709, %v725
          %v742 = vadd.f32 %v710, %v726
          %v743 = vadd.f32 %v711, %v727
          %v744 = vadd.f32 %v712, %v728
          %v745 = vadd.f32 %v713, %v729
          %v746 = vadd.f32 %v714, %v730
          %747 = vst [vmem:[%s281] sm:$0xff] %v731
          %748 = vst [vmem:[%s281 + $0x8] sm:$0xff] %v732
          %749 = vst [vmem:[%s281 + $0x10] sm:$0xff] %v733
          %750 = vst [vmem:[%s281 + $0x18] sm:$0xff] %v734
          %751 = vst [vmem:[%s281 + $0x20] sm:$0xff] %v735
          %752 = vst [vmem:[%s281 + $0x28] sm:$0xff] %v736
          %753 = vst [vmem:[%s281 + $0x30] sm:$0xff] %v737
          %754 = vst [vmem:[%s281 + $0x38] sm:$0xff] %v738
          %755 = vst [vmem:[%s281 + $0x40] sm:$0xff] %v739
          %756 = vst [vmem:[%s281 + $0x48] sm:$0xff] %v740
          %757 = vst [vmem:[%s281 + $0x50] sm:$0xff] %v741
          %758 = vst [vmem:[%s281 + $0x58] sm:$0xff] %v742
          %759 = vst [vmem:[%s281 + $0x60] sm:$0xff] %v743
          %760 = vst [vmem:[%s281 + $0x68] sm:$0xff] %v744
          %761 = vst [vmem:[%s281 + $0x70] sm:$0xff] %v745
          %762 = vst [vmem:[%s281 + $0x78] sm:$0xff] %v746
        $region52: #{tpu_custom_call.1} parent=31 // pred_fallthru
          _
        %s763 = sand.u32 %s123, 1
        %s764 = scalar_lea.sflag [#allocation5], %s763
        %s765 = sand.u32 %s123, 1
        %s766 = smul.addr %s765, 128
        %s767 = scalar_lea.vmem [#allocation9], %s766
        // Predicated region
        $region53: #{tpu_custom_call.1} parent=31 // pred_check
          %p768 = pneg %p133
        $region54: #{tpu_custom_call.1} parent=31 // pred_check_branch
          %770 = sbr.rel (%p768) target = $region56
        $region55: #{tpu_custom_call.1} parent=31 // pred_region
          %s771 = smul.u32 16, %s27
          %s773 = ssub.s32 2048, 2048
          %774 = vsyncadd %s764, %s773
          %s775 = smul.addr %s771, 128
          %s776 = scalar_lea.hbm %s3, %s775
          %s777 = sshll.u32 %s767, 4
          %s778 = int_to_ptr.vmem [resolvable:$true] %s777
          %783 = dma.vmem_to_hbm [thread:$0]  %s778, 2048, %s776, %s764, 128, 128, 8
        $region56: #{tpu_custom_call.1} parent=31 // pred_fallthru
          _
      $region32: #{tpu_custom_call.1} parent=5 // pred_fallthru
        _
      %p784 = scmp.le.s32.totalorder 2, %s18
      // Predicated region
      $region57: #{tpu_custom_call.1} parent=5 // pred_check
        %p785 = pneg %p784
      $region58: #{tpu_custom_call.1} parent=5 // pred_check_branch
        %787 = sbr.rel (%p785) target = $region60
      $region59: #{tpu_custom_call.1} parent=5 // pred_region
        %s788 = ssub.s32 %s18, 2
        // Predicated region
        $region61: #{tpu_custom_call.1} parent=59 // pred_check
          %p789 = pneg %p139
        $region62: #{tpu_custom_call.1} parent=59 // pred_check_branch
          %791 = sbr.rel (%p789) target = $region64
        $region63: #{tpu_custom_call.1} parent=59 // pred_region
          %s792 = sand.u32 %s124, 1
          %s793 = scalar_lea.sflag [#allocation5], %s792
          %s794 = sand.u32 %s124, 1
          %s795 = smul.addr %s794, 128
          %s796 = scalar_lea.vmem [#allocation9], %s795
          %797 = dma.done %s793, 2048
        $region64: #{tpu_custom_call.1} parent=59 // pred_fallthru
          _
      $region60: #{tpu_custom_call.1} parent=5 // pred_fallthru
        _
    $region6: #{tpu_custom_call.1} parent=1 // loop_footer
      %s22 = sadd.s32 1, %s18
    $region7: #{tpu_custom_call.1} parent=1 // loop_footer_branch
      %17 = sbr.rel target = $region3
    $region8: #{tpu_custom_call.1} parent=1 // loop_exit
      _
    %798 = vsyncpa [#allocation4], 1
    %s799 = scalar_lea.sflag [#allocation4], 1
    %800 = vsyncpa %s799, 1
    %801 = vsyncpa [#allocation7], 1
    %s802 = scalar_lea.sflag [#allocation7], 1
    %803 = vsyncpa %s802, 1
    %804 = vsyncpa [#allocation5], 1
    %s805 = scalar_lea.sflag [#allocation5], 1
    %806 = vsyncpa %s805, 1

</llo_original>
